<compile_context>
chip_gen: v5e
topology: v5e:2x2
jax: 0.10.0
libtpu: 0.0.40
codegen_flags: <defaults>
</compile_context>

<pallas_src>
import jax
import jax.numpy as jnp
from jax.experimental import pallas as pl
from jax.experimental.pallas import tpu as pltpu


def _net_kernel(x_ref, w1_ref, b1_ref, wd_ref, bd_ref, o_ref):
    # x:  (TB, D)  bf16      w1: (D, 144) bf16     b1: (1, 144) f32
    # wd: (144, 1) f32 = w2[:,1:2] - w2[:,0:1]     bd: (1, 1) f32 = b2[0,1]-b2[0,0]
    # o:  (TB, 2)  f32 log-probabilities
    # fc1 on the MXU: bf16 inputs, f32 accumulation, bias add in f32.
    h = jnp.dot(x_ref[...], w1_ref[...],
                preferred_element_type=jnp.float32) + b1_ref[...]

    # Two-class log-softmax via the logit difference (single (144,1) matvec).
    d = jnp.dot(h, wd_ref[...], preferred_element_type=jnp.float32) + bd_ref[...]

    # Numerically stable softplus(d) = max(d,0) + log(1 + exp(-|d|)).
    sp = jnp.maximum(d, 0.0) + jnp.log(1.0 + jnp.exp(-jnp.abs(d)))

    # log_softmax(logits)[:,0] = -softplus(d), [:,1] = d - softplus(d)
    o_ref[...] = jnp.concatenate([-sp, d - sp], axis=-1).astype(o_ref.dtype)


def net_forward(x, w1, b1, w2, b2, *, block_b=1024):
    """x: (B, D) f32 -> (B, 2) f32 log-probabilities.

    w1: (D, 144), b1: (1, 144), w2: (144, 2), b2: (1, 2)   (x @ W + b layout)
    """
    B, D = x.shape
    H = w1.shape[1]

    # Batch tile: full batch if small, otherwise a multiple-of-8 tile so the
    # (8, 128) sublane constraint is satisfied even for ragged last tiles.
    TB = B if B <= block_b else block_b
    grid = (pl.cdiv(B, TB),)

    # Feed the MXU bf16 for fc1 (f32 accumulation inside the kernel).
    x_bf = x.astype(jnp.bfloat16)
    w1_bf = w1.astype(jnp.bfloat16)
    b1_f32 = b1.reshape(1, H).astype(jnp.float32)

    # Precompute the 2-class logit-difference weights once (tiny XLA ops).
    w_diff = (w2[:, 1:2] - w2[:, 0:1]).astype(jnp.float32)   # (H, 1)
    b_diff = (b2[:, 1:2] - b2[:, 0:1]).astype(jnp.float32)   # (1, 1)

    cost = pl.CostEstimate(
        flops=2 * B * D * H + 2 * B * H,
        transcendentals=2 * B,                      # exp + log per row
        bytes_accessed=B * D * 2 + D * H * 2 + H * 4 + H * 4 + B * 2 * 4,
    )

    return pl.pallas_call(
        _net_kernel,
        out_shape=jax.ShapeDtypeStruct((B, 2), jnp.float32),
        grid=grid,
        in_specs=[
            pl.BlockSpec((TB, D), lambda i: (i, 0)),    # x: tiled over batch
            pl.BlockSpec((D, H), lambda i: (0, 0)),     # w1: resident
            pl.BlockSpec((1, H), lambda i: (0, 0)),     # b1: resident
            pl.BlockSpec((H, 1), lambda i: (0, 0)),     # w_diff: resident
            pl.BlockSpec((1, 1), lambda i: (0, 0)),     # b_diff: resident
        ],
        out_specs=pl.BlockSpec((TB, 2), lambda i: (i, 0)),
        compiler_params=pltpu.CompilerParams(
            dimension_semantics=("parallel",),          # megacore / v7x 2xTC
            vmem_limit_bytes=32 * 1024 * 1024,          # past v5e 16 MiB default
        ),
        cost_estimate=cost,
    )(x_bf, w1_bf, b1_f32, w_diff, b_diff)


def init_params(key, in_features, hidden=144, out_features=2):
    # Deterministic synthetic init mimicking PyTorch Linear's uniform(-k, k),
    # with weights stored as (in, out) for direct x @ W matmul.
    k1, k2, k3, k4 = jax.random.split(key, 4)
    bound1 = 1.0 / (in_features ** 0.5)
    bound2 = 1.0 / (hidden ** 0.5)
    w1 = jax.random.uniform(k1, (in_features, hidden), jnp.float32, -bound1, bound1)
    b1 = jax.random.uniform(k2, (1, hidden), jnp.float32, -bound1, bound1)
    w2 = jax.random.uniform(k3, (hidden, out_features), jnp.float32, -bound2, bound2)
    b2 = jax.random.uniform(k4, (1, out_features), jnp.float32, -bound2, bound2)
    return w1, b1, w2, b2


def reference_forward(x, w1, b1, w2, b2):
    # Matches the kernel's precision choices: bf16 fc1 inputs, f32 accumulation.
    h = jnp.dot(x.astype(jnp.bfloat16), w1.astype(jnp.bfloat16),
                preferred_element_type=jnp.float32) + b1
    logits = h @ w2 + b2
    return jax.nn.log_softmax(logits, axis=1)


if __name__ == "__main__":
    key = jax.random.PRNGKey(0)
    kx, kp, kx2 = jax.random.split(key, 3)

    batch, in_features = 8, 10  # X.shape[1] unknown in source; 10 tabular features
    w1, b1, w2, b2 = init_params(kp, in_features)

    # --- small batch (single grid step, full-batch tile) ---
    x = jax.random.normal(kx, (batch, in_features), jnp.float32)
    out = jax.block_until_ready(net_forward(x, w1, b1, w2, b2))
    ref = reference_forward(x, w1, b1, w2, b2)
    assert out.shape == (batch, 2)
    assert jnp.allclose(out, ref, atol=1e-4, rtol=1e-4), "mismatch vs JAX reference (B=8)"

    # --- larger batch exercising the batch grid (incl. ragged last tile) ---
    big_b = 2000
    xb = jax.random.normal(kx2, (big_b, in_features), jnp.float32)
    out_b = jax.block_until_ready(net_forward(xb, w1, b1, w2, b2, block_b=512))
    ref_b = reference_forward(xb, w1, b1, w2, b2)
    assert out_b.shape == (big_b, 2)
    assert jnp.allclose(out_b, ref_b, atol=1e-4, rtol=1e-4), "mismatch vs JAX reference (B=2000)"

    print("KERNEL_OK")
</pallas_src>

<mosaic_0001>
module attributes {stable_mosaic.version = 11 : i64} {
  func.func @_net_kernel(%arg0: i32, %arg1: memref<8x10xbf16, #tpu.memory_space<vmem>>, %arg2: memref<10x144xbf16, #tpu.memory_space<vmem>>, %arg3: memref<1x144xf32, #tpu.memory_space<vmem>>, %arg4: memref<144x1xf32, #tpu.memory_space<vmem>>, %arg5: memref<1x1xf32, #tpu.memory_space<vmem>>, %arg6: memref<8x2xf32, #tpu.memory_space<vmem>>) attributes {dimension_semantics = [#tpu.dimension_semantics<parallel>], iteration_bounds = array<i64: 1>, scalar_prefetch = 0 : i64, scratch_operands = 0 : i64, tpu.core_type = #tpu.core_type<tc>, window_params = [{transform_indices = @transform_0, window_bounds = array<i64: 8, 10>}, {pipeline_mode = #tpu.pipeline_mode<synchronous>, transform_indices = @transform_1, window_bounds = array<i64: 10, 144>}, {pipeline_mode = #tpu.pipeline_mode<synchronous>, transform_indices = @transform_2, window_bounds = array<i64: 1, 144>}, {pipeline_mode = #tpu.pipeline_mode<synchronous>, transform_indices = @transform_3, window_bounds = array<i64: 144, 1>}, {pipeline_mode = #tpu.pipeline_mode<synchronous>, transform_indices = @transform_4, window_bounds = array<i64: 1, 1>}, {transform_indices = @transform_5, window_bounds = array<i64: 8, 2>}]} {
    %c0 = arith.constant 0 : index
    %c0_0 = arith.constant 0 : index
    %0 = vector.load %arg1[%c0, %c0_0] : memref<8x10xbf16, #tpu.memory_space<vmem>>, vector<8x10xbf16>
    %c0_1 = arith.constant 0 : index
    %c0_2 = arith.constant 0 : index
    %1 = vector.load %arg2[%c0_1, %c0_2] : memref<10x144xbf16, #tpu.memory_space<vmem>>, vector<10x144xbf16>
    %cst = arith.constant dense<0.000000e+00> : vector<8x144xf32>
    %2 = tpu.matmul %0, %1, %cst {dimension_numbers = #tpu.dot_dimension_numbers<[1], [0], [0], [1], [0, 0, 1, 1], [], []>} : vector<8x10xbf16>, vector<10x144xbf16>, vector<8x144xf32> -> vector<8x144xf32>
    %c0_3 = arith.constant 0 : index
    %c0_4 = arith.constant 0 : index
    %3 = vector.load %arg3[%c0_3, %c0_4] : memref<1x144xf32, #tpu.memory_space<vmem>>, vector<1x144xf32>
    %4 = vector.broadcast %3 : vector<1x144xf32> to vector<8x144xf32>
    %5 = arith.addf %2, %4 : vector<8x144xf32>
    %c0_5 = arith.constant 0 : index
    %c0_6 = arith.constant 0 : index
    %6 = vector.load %arg4[%c0_5, %c0_6] : memref<144x1xf32, #tpu.memory_space<vmem>>, vector<144x1xf32>
    %cst_7 = arith.constant dense<0.000000e+00> : vector<8x1xf32>
    %7 = tpu.matmul %5, %6, %cst_7 {dimension_numbers = #tpu.dot_dimension_numbers<[1], [0], [0], [1], [0, 0, 1, 1], [], []>} : vector<8x144xf32>, vector<144x1xf32>, vector<8x1xf32> -> vector<8x1xf32>
    %c0_8 = arith.constant 0 : index
    %c0_9 = arith.constant 0 : index
    %8 = vector.load %arg5[%c0_8, %c0_9] : memref<1x1xf32, #tpu.memory_space<vmem>>, vector<1x1xf32>
    %9 = vector.broadcast %8 : vector<1x1xf32> to vector<8x1xf32>
    %10 = arith.addf %7, %9 : vector<8x1xf32>
    %cst_10 = arith.constant 0.000000e+00 : f32
    %11 = vector.broadcast %cst_10 : f32 to vector<8x1xf32>
    %12 = arith.maximumf %10, %11 : vector<8x1xf32>
    %13 = math.absf %10 : vector<8x1xf32>
    %cst_11 = arith.constant 0.000000e+00 : f32
    %14 = vector.broadcast %cst_11 : f32 to vector<8x1xf32>
    %15 = arith.subf %14, %13 : vector<8x1xf32>
    %16 = math.exp %15 : vector<8x1xf32>
    %cst_12 = arith.constant 1.000000e+00 : f32
    %17 = vector.broadcast %cst_12 : f32 to vector<8x1xf32>
    %18 = arith.addf %17, %16 : vector<8x1xf32>
    %19 = math.log %18 : vector<8x1xf32>
    %20 = arith.addf %12, %19 : vector<8x1xf32>
    %cst_13 = arith.constant 0.000000e+00 : f32
    %21 = vector.broadcast %cst_13 : f32 to vector<8x1xf32>
    %22 = arith.subf %21, %20 : vector<8x1xf32>
    %23 = arith.subf %10, %20 : vector<8x1xf32>
    %24 = tpu.concatenate %22, %23 in 1 : vector<8x1xf32>, vector<8x1xf32> -> vector<8x2xf32>
    %c0_14 = arith.constant 0 : index
    %c0_15 = arith.constant 0 : index
    %25 = vector.load %arg6[%c0_14, %c0_15] : memref<8x2xf32, #tpu.memory_space<vmem>>, vector<8x2xf32>
    tpu.vector_store %arg6[%c0_14, %c0_15], %24 {strides = array<i32>} : memref<8x2xf32, #tpu.memory_space<vmem>>, vector<8x2xf32>,
    return
  }
  func.func @transform_0(%arg0: i32) -> (i32, i32) {
    %c0_i32 = arith.constant 0 : i32
    %c0_i32_0 = arith.constant 0 : i32
    return %arg0, %c0_i32 : i32, i32
  }
  func.func @transform_1(%arg0: i32) -> (i32, i32) {
    %c0_i32 = arith.constant 0 : i32
    %c0_i32_0 = arith.constant 0 : i32
    %c0_i32_1 = arith.constant 0 : i32
    return %c0_i32, %c0_i32_0 : i32, i32
  }
  func.func @transform_2(%arg0: i32) -> (i32, i32) {
    %c0_i32 = arith.constant 0 : i32
    %c0_i32_0 = arith.constant 0 : i32
    %c0_i32_1 = arith.constant 0 : i32
    return %c0_i32, %c0_i32_0 : i32, i32
  }
  func.func @transform_3(%arg0: i32) -> (i32, i32) {
    %c0_i32 = arith.constant 0 : i32
    %c0_i32_0 = arith.constant 0 : i32
    %c0_i32_1 = arith.constant 0 : i32
    return %c0_i32, %c0_i32_0 : i32, i32
  }
  func.func @transform_4(%arg0: i32) -> (i32, i32) {
    %c0_i32 = arith.constant 0 : i32
    %c0_i32_0 = arith.constant 0 : i32
    %c0_i32_1 = arith.constant 0 : i32
    return %c0_i32, %c0_i32_0 : i32, i32
  }
  func.func @transform_5(%arg0: i32) -> (i32, i32) {
    %c0_i32 = arith.constant 0 : i32
    %c0_i32_0 = arith.constant 0 : i32
    return %arg0, %c0_i32 : i32, i32
  }
}

</mosaic_0001>

<llo_original>
// kernel: tpu_custom_call.1
$region0: #{tpu_custom_call.1}
  #allocation0 [shape = 'u32[]', space=smem, size = 0x4, offset = 0x4, fixed_abs, tag = 'smem constant byte address 0x4 - core index']
  #allocation1 [shape = 'u32[72,128]{1,0:T(1,128)}', space=vmem, size = 0x9000, scoped, tag = 'internal scratch']
  #allocation2 [shape = 'f32[1,1]{1,0:T(1,128)S(1)}', space=vmem, size = 0x200, scoped, tag = 'scoped memory for tpu_custom_call.1']
  %s0 = inlined_call_operand.vmem [shape: bf16[8,10], index: 0, kind: input, shape index: {}]
  %s1 = inlined_call_operand.vmem [shape: bf16[10,144], index: 1, kind: input, shape index: {}]
  %s2 = inlined_call_operand.vmem [shape: f32[1,144], index: 2, kind: input, shape index: {}]
  %s3 = inlined_call_operand.vmem [shape: f32[144,1], index: 3, kind: input, shape index: {}]
  %s4 = inlined_call_operand.<no memory space> [shape: f32[1,1], index: 4, kind: input, shape index: {}]
  %s5 = inlined_call_operand.vmem [shape: f32[8,2], index: 5, kind: output, shape index: {}]
  %s6 = sld [smem:[#allocation0]]
  $region30: #{tpu_custom_call.1} parent=0
    _
  %s8 = ssub.s32 1, %s6
  %s9 = scalar_select 0, %s8, %s6
  %v10 = vstv %s4
  %11 = vst [vmem:[#allocation2] sm:$0x1] %v10
  // Predicated region
  $region2: #{tpu_custom_call.1} parent=0 // pred_check
    _
  $region3: #{tpu_custom_call.1} parent=0 // pred_check_branch
    %13 = sbr.rel (0) target = $region5
  $region4: #{tpu_custom_call.1} parent=0 // pred_region
    _
  $region5: #{tpu_custom_call.1} parent=0 // pred_fallthru
    _
  // Predicated region
  $region6: #{tpu_custom_call.1} parent=0 // pred_check
    _
  $region7: #{tpu_custom_call.1} parent=0 // pred_check_branch
    %15 = sbr.rel (0) target = $region9
  $region8: #{tpu_custom_call.1} parent=0 // pred_region
    _
  $region9: #{tpu_custom_call.1} parent=0 // pred_fallthru
    _
  // Predicated region
  $region10: #{tpu_custom_call.1} parent=0 // pred_check
    _
  $region11: #{tpu_custom_call.1} parent=0 // pred_check_branch
    %17 = sbr.rel (0) target = $region13
  $region12: #{tpu_custom_call.1} parent=0 // pred_region
    _
  $region13: #{tpu_custom_call.1} parent=0 // pred_fallthru
    _
  // Predicated region
  $region14: #{tpu_custom_call.1} parent=0 // pred_check
    _
  $region15: #{tpu_custom_call.1} parent=0 // pred_check_branch
    %19 = sbr.rel (0) target = $region17
  $region16: #{tpu_custom_call.1} parent=0 // pred_region
    _
  $region17: #{tpu_custom_call.1} parent=0 // pred_fallthru
    _
  // Predicated region
  $region18: #{tpu_custom_call.1} parent=0 // pred_check
    _
  $region19: #{tpu_custom_call.1} parent=0 // pred_check_branch
    %21 = sbr.rel (0) target = $region21
  $region20: #{tpu_custom_call.1} parent=0 // pred_region
    _
  $region21: #{tpu_custom_call.1} parent=0 // pred_fallthru
    _
  %v23 = vld [vmem:[%s0] sm:$0xf]
  %v24 = vld [vmem:[%s1] sm:$0xff]
  %v25 = vld [vmem:[%s1 + $0x8] sm:$0x11]
  %v26 = vld [vmem:[%s2] sm:$0x3]
  %v28 = vperm.slane %v26, 0
  %v29 = vperm.slane %v26, 1
  %v34 = vunpack.c.l.b16 %v24
  %v35 = vunpack.c.h.b16 %v24
  %v36 = vunpack.c.l.b16 %v25
  %v37 = vunpack.c.h.b16 %v25
  %v38 = vpack.c.b16 %v36, %v34
  %v39 = vpack.c.b16 %v37, %v35
  %vm40 = vcmask 80896
  %v42 = vsel %vm40, %v23, 0
  %vm44 = vcmask 1044480
  %v46 = vsel %vm44, %v38, 0
  %v49 = vsel %vm44, %v39, 0
  %51 = vmatpush.bf16.msra.mxu0 0
  %52 = vmatpush.bf16.msra.mxu0 0
  %53 = vmatpush.bf16.msra.mxu0 0
  %54 = vmatpush.bf16.msra.mxu0 0
  %55 = vmatpush.bf16.msra.mxu0 0
  %56 = vmatpush.bf16.msra.mxu0 0
  %57 = vmatpush.bf16.msra.mxu0 0
  %58 = vmatpush.bf16.msra.mxu0 %v46
  %59 = vmatmul.bf16.gmra.mxu0 %v42
  %v60 = vpop.f32.mrf.mxu0
  %v61 = vadd.f32 %v28, %v60
  %v62 = vpop.f32.mrf.mxu0
  %63 = vdwg.mxu0
  %64 = vmatpush.bf16.msra.mxu0 0
  %65 = vmatpush.bf16.msra.mxu0 0
  %66 = vmatpush.bf16.msra.mxu0 0
  %67 = vmatpush.bf16.msra.mxu0 0
  %68 = vmatpush.bf16.msra.mxu0 0
  %69 = vmatpush.bf16.msra.mxu0 0
  %70 = vmatpush.bf16.msra.mxu0 0
  %71 = vmatpush.bf16.msra.mxu0 %v49
  %72 = vmatmul.bf16.gmra.mxu0 %v42
  %v73 = vpop.f32.mrf.mxu0
  %v74 = vadd.f32 %v29, %v73
  %v75 = vpop.f32.mrf.mxu0
  %76 = vdwg.mxu0
  %v77 = vld [vmem:[%s3] sm:$0xff]
  %v78 = vld [vmem:[%s3 + $0x8] sm:$0xff]
  %v79 = vld [vmem:[%s3 + $0x10] sm:$0xff]
  %v80 = vld [vmem:[%s3 + $0x18] sm:$0xff]
  %v81 = vld [vmem:[%s3 + $0x20] sm:$0xff]
  %v82 = vld [vmem:[%s3 + $0x28] sm:$0xff]
  %v83 = vld [vmem:[%s3 + $0x30] sm:$0xff]
  %v84 = vld [vmem:[%s3 + $0x38] sm:$0xff]
  %v85 = vld [vmem:[%s3 + $0x40] sm:$0xff]
  %v86 = vld [vmem:[%s3 + $0x48] sm:$0xff]
  %v87 = vld [vmem:[%s3 + $0x50] sm:$0xff]
  %v88 = vld [vmem:[%s3 + $0x58] sm:$0xff]
  %v89 = vld [vmem:[%s3 + $0x60] sm:$0xff]
  %v90 = vld [vmem:[%s3 + $0x68] sm:$0xff]
  %v91 = vld [vmem:[%s3 + $0x70] sm:$0xff]
  %v92 = vld [vmem:[%s3 + $0x78] sm:$0xff]
  %v93 = vld [vmem:[%s3 + $0x80] sm:$0xff]
  %v94 = vld [vmem:[%s3 + $0x88] sm:$0xff]
  %v95 = vld [vmem:[#allocation2] sm:$0x1]
  %v97 = vperm.slane %v95, 0
  %vm99 = vcmask 130048
  %v101 = vsel %vm99, %v74, 0
  %103 = vmatpush.msra.mxu0 %v92
  %104 = vmatpush.msra.mxu0 %v91
  %105 = vmatpush.msra.mxu0 %v90
  %106 = vmatpush.msra.mxu0 %v89
  %107 = vmatpush.msra.mxu0 %v88
  %108 = vmatpush.msra.mxu0 %v87
  %109 = vmatpush.msra.mxu0 %v86
  %110 = vmatpush.msra.mxu0 %v85
  %111 = vmatpush.msra.mxu0 %v84
  %112 = vmatpush.msra.mxu0 %v83
  %113 = vmatpush.msra.mxu0 %v82
  %114 = vmatpush.msra.mxu0 %v81
  %115 = vmatpush.msra.mxu0 %v80
  %116 = vmatpush.msra.mxu0 %v79
  %117 = vmatpush.msra.mxu0 %v78
  %118 = vmatpush.msra.mxu0 %v77
  %119 = vmatmul.f32.gmra.mxu0 %v61
  %v120 = vpop.f32.mrf.mxu0
  %v121 = vadd.f32 %v97, %v120
  %122 = vdwg.mxu0
  %123 = vmatpush.msra.mxu0 0.0
  %124 = vmatpush.msra.mxu0 0.0
  %125 = vmatpush.msra.mxu0 0.0
  %126 = vmatpush.msra.mxu0 0.0
  %127 = vmatpush.msra.mxu0 0.0
  %128 = vmatpush.msra.mxu0 0.0
  %129 = vmatpush.msra.mxu0 0.0
  %130 = vmatpush.msra.mxu0 0.0
  %131 = vmatpush.msra.mxu0 0.0
  %132 = vmatpush.msra.mxu0 0.0
  %133 = vmatpush.msra.mxu0 0.0
  %134 = vmatpush.msra.mxu0 0.0
  %135 = vmatpush.msra.mxu0 0.0
  %136 = vmatpush.msra.mxu0 0.0
  %137 = vmatpush.msra.mxu0 %v94
  %138 = vmatpush.msra.mxu0 %v93
  %139 = vmatmul.f32.gmra.mxu0 %v101
  %v140 = vpop.f32.mrf.mxu0
  %v141 = vadd.f32 %v121, %v140
  %142 = vdwg.mxu0
  %v143 = vmax.f32 %v141, 0.0
  %v144 = vand.u32 2147483647, %v141
  %v145 = vsub.f32 0.0, %v144
  %v146 = vmul.f32 %v145, 1.442695
  %v147 = vpow.pop %v146
  %v148 = vadd.f32 %v147, 1.0
  %v149 = vlog2.pop %v148
  %v150 = vmul.f32 %v149, 0.6931472
  %v151 = vadd.f32 %v143, %v150
  %v152 = vsub.f32 0.0, %v151
  %v153 = vsub.f32 %v141, %v151
  %155 = vrot.lane.b32.xlu0 %v153, 1
  %v156 = vpop.permute.xlu0 %155
  %vm158 = vcmask 7168
  %v159 = vsel %vm158, %v152, %v156
  %vm160 = vcmask 15360
  %161 = vst.msk [vmem:[%s5] sm:$0xff] %vm160, %v159
  // Predicated region
  $region22: #{tpu_custom_call.1} parent=0 // pred_check
    _
  $region23: #{tpu_custom_call.1} parent=0 // pred_check_branch
    %163 = sbr.rel (0) target = $region25
  $region24: #{tpu_custom_call.1} parent=0 // pred_region
    _
  $region25: #{tpu_custom_call.1} parent=0 // pred_fallthru
    _
  // Predicated region
  $region26: #{tpu_custom_call.1} parent=0 // pred_check
    _
  $region27: #{tpu_custom_call.1} parent=0 // pred_check_branch
    %165 = sbr.rel (0) target = $region29
  $region28: #{tpu_custom_call.1} parent=0 // pred_region
    _
  $region29: #{tpu_custom_call.1} parent=0 // pred_fallthru
    _

</llo_original>
